<compile_context>
chip_gen: v7x
topology: tpu7x:2x2x1
jax: 0.10.0
libtpu: 0.0.40
codegen_flags: <defaults>
</compile_context>

<pallas_src>
import functools

import jax
import jax.numpy as jnp
from jax.experimental import pallas as pl
from jax.experimental.pallas import tpu as pltpu

IN_FEATURES = 768   # fixed by nn.Linear(768, 5) in the module
OUT_FEATURES = 5
LANE = 128          # lane-dense padding target for the output channel dim


def _round_up(x, m):
    return (x + m - 1) // m * m


def _section_ext_kernel(x_ref, w_ref, b_ref, m_ref, o_ref):
    # MXU matmul: bf16 operands, f32 accumulation.
    xb = x_ref[...].astype(jnp.bfloat16)          # (tm, H)
    y = jnp.dot(xb, w_ref[...],                   # (H, 128) bf16, zero-padded
                preferred_element_type=jnp.float32)
    # Fused epilogue (VPU): bias add + mask broadcast multiply.
    y = (y + b_ref[...]) * m_ref[...]             # (tm,128)*(1,128)/(tm,1)
    o_ref[...] = y.astype(o_ref.dtype)


def section_ext_forward(x, mask, w, b, *, tm=256):
    """x: (B, N, H) f32, mask: (B, N), w: (H, C), b: (C,)  ->  (B, N, C)."""
    B, N, H = x.shape
    C = w.shape[1]
    M = B * N

    # Pad output channels to a full lane width (lane-dense stores), weight in bf16.
    CP = _round_up(C, LANE)
    w_p = jnp.zeros((H, CP), jnp.bfloat16).at[:, :C].set(w.astype(jnp.bfloat16))
    b_p = jnp.zeros((1, CP), jnp.float32).at[:, :C].set(b.astype(jnp.float32))

    x2 = x.reshape(M, H).astype(jnp.float32)
    m2 = mask.reshape(M, 1).astype(jnp.float32)

    # Large row tile; pad rows so the grid divides exactly (no silent truncation).
    tm_eff = min(tm, _round_up(M, 8))
    Mp = _round_up(M, tm_eff)
    if Mp != M:
        x2 = jnp.pad(x2, ((0, Mp - M), (0, 0)))
        m2 = jnp.pad(m2, ((0, Mp - M), (0, 0)))

    out = pl.pallas_call(
        _section_ext_kernel,
        out_shape=jax.ShapeDtypeStruct((Mp, CP), jnp.float32),
        grid=(pl.cdiv(Mp, tm_eff),),
        in_specs=[
            pl.BlockSpec((tm_eff, H), lambda i: (i, 0)),   # activations
            pl.BlockSpec((H, CP), lambda i: (0, 0)),       # padded weight (resident)
            pl.BlockSpec((1, CP), lambda i: (0, 0)),       # padded bias
            pl.BlockSpec((tm_eff, 1), lambda i: (i, 0)),   # per-row mask
        ],
        out_specs=pl.BlockSpec((tm_eff, CP), lambda i: (i, 0)),
        compiler_params=pltpu.CompilerParams(
            dimension_semantics=("parallel",)),
    )(x2, w_p, b_p, m2)

    return out[:M, :C].reshape(B, N, C)


if __name__ == "__main__":
    B, N = 2, 8   # batch of 2, 8 sentences; hidden fixed at 768 by the module

    key = jax.random.PRNGKey(0)
    kx, kw, kb, km = jax.random.split(key, 4)

    x = jax.random.normal(kx, (B, N, IN_FEATURES), dtype=jnp.float32)
    # TODO(synk): xavier_uniform_ init of the PyTorch layer replaced by a scaled
    #             normal; initialization is not part of the forward semantics.
    w = 0.02 * jax.random.normal(kw, (IN_FEATURES, OUT_FEATURES), dtype=jnp.float32)
    b = 0.02 * jax.random.normal(kb, (OUT_FEATURES,), dtype=jnp.float32)
    mask = (jax.random.uniform(km, (B, N)) > 0.25).astype(jnp.float32)

    fwd = jax.jit(section_ext_forward)
    scores = fwd(x, mask, w, b)
    jax.block_until_ready(scores)

    # Pure-JAX f32 reference: (x @ W + b) * mask[..., None]
    ref = (jnp.einsum("bnh,hc->bnc", x, w) + b) * mask[:, :, None]

    assert scores.shape == (B, N, OUT_FEATURES)
    assert bool(jnp.all(jnp.isfinite(scores)))
    assert bool(jnp.allclose(scores, ref, atol=5e-2, rtol=5e-2))
    print("KERNEL_OK")
</pallas_src>

<mosaic_0001>
module attributes {stable_mosaic.version = 11 : i64} {
  func.func @_section_ext_kernel(%arg0: i32, %arg1: memref<16x768xf32, #tpu.memory_space<vmem>>, %arg2: memref<768x128xbf16, #tpu.memory_space<vmem>>, %arg3: memref<1x128xf32, #tpu.memory_space<vmem>>, %arg4: memref<16x1xf32, #tpu.memory_space<vmem>>, %arg5: memref<16x128xf32, #tpu.memory_space<vmem>>) attributes {dimension_semantics = [#tpu.dimension_semantics<parallel>], iteration_bounds = array<i64: 1>, scalar_prefetch = 0 : i64, scratch_operands = 0 : i64, tpu.core_type = #tpu.core_type<tc>, window_params = [{transform_indices = @transform_0, window_bounds = array<i64: 16, 768>}, {pipeline_mode = #tpu.pipeline_mode<synchronous>, transform_indices = @transform_1, window_bounds = array<i64: 768, 128>}, {pipeline_mode = #tpu.pipeline_mode<synchronous>, transform_indices = @transform_2, window_bounds = array<i64: 1, 128>}, {transform_indices = @transform_3, window_bounds = array<i64: 16, 1>}, {transform_indices = @transform_4, window_bounds = array<i64: 16, 128>}]} {
    %c0 = arith.constant 0 : index
    %c0_0 = arith.constant 0 : index
    %0 = vector.load %arg1[%c0, %c0_0] : memref<16x768xf32, #tpu.memory_space<vmem>>, vector<16x768xf32>
    %1 = arith.truncf %0 : vector<16x768xf32> to vector<16x768xbf16>
    %c0_1 = arith.constant 0 : index
    %c0_2 = arith.constant 0 : index
    %2 = vector.load %arg2[%c0_1, %c0_2] : memref<768x128xbf16, #tpu.memory_space<vmem>>, vector<768x128xbf16>
    %cst = arith.constant dense<0.000000e+00> : vector<16x128xf32>
    %3 = tpu.matmul %1, %2, %cst {dimension_numbers = #tpu.dot_dimension_numbers<[1], [0], [0], [1], [0, 0, 1, 1], [], []>} : vector<16x768xbf16>, vector<768x128xbf16>, vector<16x128xf32> -> vector<16x128xf32>
    %c0_3 = arith.constant 0 : index
    %c0_4 = arith.constant 0 : index
    %4 = vector.load %arg3[%c0_3, %c0_4] : memref<1x128xf32, #tpu.memory_space<vmem>>, vector<1x128xf32>
    %5 = vector.broadcast %4 : vector<1x128xf32> to vector<16x128xf32>
    %6 = arith.addf %3, %5 : vector<16x128xf32>
    %c0_5 = arith.constant 0 : index
    %c0_6 = arith.constant 0 : index
    %7 = vector.load %arg4[%c0_5, %c0_6] : memref<16x1xf32, #tpu.memory_space<vmem>>, vector<16x1xf32>
    %8 = vector.broadcast %7 : vector<16x1xf32> to vector<16x128xf32>
    %9 = arith.mulf %6, %8 : vector<16x128xf32>
    %c0_7 = arith.constant 0 : index
    %c0_8 = arith.constant 0 : index
    %10 = vector.load %arg5[%c0_7, %c0_8] : memref<16x128xf32, #tpu.memory_space<vmem>>, vector<16x128xf32>
    tpu.vector_store %arg5[%c0_7, %c0_8], %9 {strides = array<i32>} : memref<16x128xf32, #tpu.memory_space<vmem>>, vector<16x128xf32>,
    return
  }
  func.func @transform_0(%arg0: i32) -> (i32, i32) {
    %c0_i32 = arith.constant 0 : i32
    %c0_i32_0 = arith.constant 0 : i32
    return %arg0, %c0_i32 : i32, i32
  }
  func.func @transform_1(%arg0: i32) -> (i32, i32) {
    %c0_i32 = arith.constant 0 : i32
    %c0_i32_0 = arith.constant 0 : i32
    %c0_i32_1 = arith.constant 0 : i32
    return %c0_i32, %c0_i32_0 : i32, i32
  }
  func.func @transform_2(%arg0: i32) -> (i32, i32) {
    %c0_i32 = arith.constant 0 : i32
    %c0_i32_0 = arith.constant 0 : i32
    %c0_i32_1 = arith.constant 0 : i32
    return %c0_i32, %c0_i32_0 : i32, i32
  }
  func.func @transform_3(%arg0: i32) -> (i32, i32) {
    %c0_i32 = arith.constant 0 : i32
    %c0_i32_0 = arith.constant 0 : i32
    return %arg0, %c0_i32 : i32, i32
  }
  func.func @transform_4(%arg0: i32) -> (i32, i32) {
    %c0_i32 = arith.constant 0 : i32
    %c0_i32_0 = arith.constant 0 : i32
    return %arg0, %c0_i32 : i32, i32
  }
}

</mosaic_0001>

<llo_original>
// kernel: section_ext_forward.1
$region0: #{section_ext_forward.1}
  #allocation0 [shape = 'u32[]', space=smem, size = 0x4, offset = 0x4, fixed_abs, tag = 'smem constant byte address 0x4 - core index']
  #allocation1 [shape = 'u32[144,128]{1,0:T(1,128)}', space=vmem, size = 0x12000, scoped, tag = 'internal scratch']
  %s0 = inlined_call_operand.vmem [shape: f32[16,768], index: 0, kind: input, shape index: {}]
  %s1 = inlined_call_operand.vmem [shape: bf16[768,128], index: 1, kind: input, shape index: {}]
  %s2 = inlined_call_operand.vmem [shape: f32[1,128], index: 2, kind: input, shape index: {}]
  %s3 = inlined_call_operand.vmem [shape: f32[16,1], index: 3, kind: input, shape index: {}]
  %s4 = inlined_call_operand.vmem [shape: f32[16,128], index: 4, kind: output, shape index: {}]
  %s5 = sld [smem:[#allocation0]]
  $region26: #{section_ext_forward.1} parent=0
    _
  %s7 = ssub.s32 1, %s5
  %s8 = scalar_select 0, %s7, %s5
  // Predicated region
  $region2: #{section_ext_forward.1} parent=0 // pred_check
    _
  $region3: #{section_ext_forward.1} parent=0 // pred_check_branch
    %10 = sbr.rel (0) target = $region5
  $region4: #{section_ext_forward.1} parent=0 // pred_region
    _
  $region5: #{section_ext_forward.1} parent=0 // pred_fallthru
    _
  // Predicated region
  $region6: #{section_ext_forward.1} parent=0 // pred_check
    _
  $region7: #{section_ext_forward.1} parent=0 // pred_check_branch
    %12 = sbr.rel (0) target = $region9
  $region8: #{section_ext_forward.1} parent=0 // pred_region
    _
  $region9: #{section_ext_forward.1} parent=0 // pred_fallthru
    _
  // Predicated region
  $region10: #{section_ext_forward.1} parent=0 // pred_check
    _
  $region11: #{section_ext_forward.1} parent=0 // pred_check_branch
    %14 = sbr.rel (0) target = $region13
  $region12: #{section_ext_forward.1} parent=0 // pred_region
    _
  $region13: #{section_ext_forward.1} parent=0 // pred_fallthru
    _
  // Predicated region
  $region14: #{section_ext_forward.1} parent=0 // pred_check
    _
  $region15: #{section_ext_forward.1} parent=0 // pred_check_branch
    %16 = sbr.rel (0) target = $region17
  $region16: #{section_ext_forward.1} parent=0 // pred_region
    _
  $region17: #{section_ext_forward.1} parent=0 // pred_fallthru
    _
  %v18 = vld [vmem:[%s0] sm:$0xff]
  %v19 = vld [vmem:[%s0 + $0x8] sm:$0xff]
  %v20 = vld [vmem:[%s0 + $0x10] sm:$0xff]
  %v21 = vld [vmem:[%s0 + $0x18] sm:$0xff]
  %v22 = vld [vmem:[%s0 + $0x20] sm:$0xff]
  %v23 = vld [vmem:[%s0 + $0x28] sm:$0xff]
  %v24 = vld [vmem:[%s0 + $0x30] sm:$0xff]
  %v25 = vld [vmem:[%s0 + $0x38] sm:$0xff]
  %v26 = vld [vmem:[%s0 + $0x40] sm:$0xff]
  %v27 = vld [vmem:[%s0 + $0x48] sm:$0xff]
  %v28 = vld [vmem:[%s0 + $0x50] sm:$0xff]
  %v29 = vld [vmem:[%s0 + $0x58] sm:$0xff]
  %v30 = vpack.c.bf16 %v24, %v18
  %v31 = vpack.c.bf16 %v25, %v19
  %v32 = vpack.c.bf16 %v26, %v20
  %v33 = vpack.c.bf16 %v27, %v21
  %v34 = vpack.c.bf16 %v28, %v22
  %v35 = vpack.c.bf16 %v29, %v23
  %v36 = vld [vmem:[%s1] sm:$0xf]
  %v37 = vld [vmem:[%s1 + $0x4] sm:$0xf]
  %v38 = vld [vmem:[%s1 + $0x8] sm:$0xf]
  %v39 = vld [vmem:[%s1 + $0xc] sm:$0xf]
  %v40 = vld [vmem:[%s1 + $0x10] sm:$0xf]
  %v41 = vld [vmem:[%s1 + $0x14] sm:$0xf]
  %v42 = vld [vmem:[%s1 + $0x18] sm:$0xf]
  %v43 = vld [vmem:[%s1 + $0x1c] sm:$0xf]
  %v44 = vld [vmem:[%s1 + $0x20] sm:$0xf]
  %v45 = vld [vmem:[%s1 + $0x24] sm:$0xf]
  %v46 = vld [vmem:[%s1 + $0x28] sm:$0xf]
  %v47 = vld [vmem:[%s1 + $0x2c] sm:$0xf]
  %v48 = vld [vmem:[%s1 + $0x30] sm:$0xf]
  %v49 = vld [vmem:[%s1 + $0x34] sm:$0xf]
  %v50 = vld [vmem:[%s1 + $0x38] sm:$0xf]
  %v51 = vld [vmem:[%s1 + $0x3c] sm:$0xf]
  %v52 = vld [vmem:[%s1 + $0x40] sm:$0xf]
  %v53 = vld [vmem:[%s1 + $0x44] sm:$0xf]
  %v54 = vld [vmem:[%s1 + $0x48] sm:$0xf]
  %v55 = vld [vmem:[%s1 + $0x4c] sm:$0xf]
  %v56 = vld [vmem:[%s1 + $0x50] sm:$0xf]
  %v57 = vld [vmem:[%s1 + $0x54] sm:$0xf]
  %v58 = vld [vmem:[%s1 + $0x58] sm:$0xf]
  %v59 = vld [vmem:[%s1 + $0x5c] sm:$0xf]
  %v60 = vld [vmem:[%s1 + $0x60] sm:$0xf]
  %v61 = vld [vmem:[%s1 + $0x64] sm:$0xf]
  %v62 = vld [vmem:[%s1 + $0x68] sm:$0xf]
  %v63 = vld [vmem:[%s1 + $0x6c] sm:$0xf]
  %v64 = vld [vmem:[%s1 + $0x70] sm:$0xf]
  %v65 = vld [vmem:[%s1 + $0x74] sm:$0xf]
  %v66 = vld [vmem:[%s1 + $0x78] sm:$0xf]
  %v67 = vld [vmem:[%s1 + $0x7c] sm:$0xf]
  %v68 = vld [vmem:[%s1 + $0x80] sm:$0xf]
  %v69 = vld [vmem:[%s1 + $0x84] sm:$0xf]
  %v70 = vld [vmem:[%s1 + $0x88] sm:$0xf]
  %v71 = vld [vmem:[%s1 + $0x8c] sm:$0xf]
  %v72 = vld [vmem:[%s1 + $0x90] sm:$0xf]
  %v73 = vld [vmem:[%s1 + $0x94] sm:$0xf]
  %v74 = vld [vmem:[%s1 + $0x98] sm:$0xf]
  %v75 = vld [vmem:[%s1 + $0x9c] sm:$0xf]
  %v76 = vld [vmem:[%s1 + $0xa0] sm:$0xf]
  %v77 = vld [vmem:[%s1 + $0xa4] sm:$0xf]
  %v78 = vld [vmem:[%s1 + $0xa8] sm:$0xf]
  %v79 = vld [vmem:[%s1 + $0xac] sm:$0xf]
  %v80 = vld [vmem:[%s1 + $0xb0] sm:$0xf]
  %v81 = vld [vmem:[%s1 + $0xb4] sm:$0xf]
  %v82 = vld [vmem:[%s1 + $0xb8] sm:$0xf]
  %v83 = vld [vmem:[%s1 + $0xbc] sm:$0xf]
  %v84 = vld [vmem:[%s1 + $0xc0] sm:$0xf]
  %v85 = vld [vmem:[%s1 + $0xc4] sm:$0xf]
  %v86 = vld [vmem:[%s1 + $0xc8] sm:$0xf]
  %v87 = vld [vmem:[%s1 + $0xcc] sm:$0xf]
  %v88 = vld [vmem:[%s1 + $0xd0] sm:$0xf]
  %v89 = vld [vmem:[%s1 + $0xd4] sm:$0xf]
  %v90 = vld [vmem:[%s1 + $0xd8] sm:$0xf]
  %v91 = vld [vmem:[%s1 + $0xdc] sm:$0xf]
  %v92 = vld [vmem:[%s1 + $0xe0] sm:$0xf]
  %v93 = vld [vmem:[%s1 + $0xe4] sm:$0xf]
  %v94 = vld [vmem:[%s1 + $0xe8] sm:$0xf]
  %v95 = vld [vmem:[%s1 + $0xec] sm:$0xf]
  %v96 = vld [vmem:[%s1 + $0xf0] sm:$0xf]
  %v97 = vld [vmem:[%s1 + $0xf4] sm:$0xf]
  %v98 = vld [vmem:[%s1 + $0xf8] sm:$0xf]
  %v99 = vld [vmem:[%s1 + $0xfc] sm:$0xf]
  %v100 = vld [vmem:[%s1 + $0x100] sm:$0xf]
  %v101 = vld [vmem:[%s1 + $0x104] sm:$0xf]
  %v102 = vld [vmem:[%s1 + $0x108] sm:$0xf]
  %v103 = vld [vmem:[%s1 + $0x10c] sm:$0xf]
  %v104 = vld [vmem:[%s1 + $0x110] sm:$0xf]
  %v105 = vld [vmem:[%s1 + $0x114] sm:$0xf]
  %v106 = vld [vmem:[%s1 + $0x118] sm:$0xf]
  %v107 = vld [vmem:[%s1 + $0x11c] sm:$0xf]
  %v108 = vld [vmem:[%s1 + $0x120] sm:$0xf]
  %v109 = vld [vmem:[%s1 + $0x124] sm:$0xf]
  %v110 = vld [vmem:[%s1 + $0x128] sm:$0xf]
  %v111 = vld [vmem:[%s1 + $0x12c] sm:$0xf]
  %v112 = vld [vmem:[%s1 + $0x130] sm:$0xf]
  %v113 = vld [vmem:[%s1 + $0x134] sm:$0xf]
  %v114 = vld [vmem:[%s1 + $0x138] sm:$0xf]
  %v115 = vld [vmem:[%s1 + $0x13c] sm:$0xf]
  %v116 = vld [vmem:[%s1 + $0x140] sm:$0xf]
  %v117 = vld [vmem:[%s1 + $0x144] sm:$0xf]
  %v118 = vld [vmem:[%s1 + $0x148] sm:$0xf]
  %v119 = vld [vmem:[%s1 + $0x14c] sm:$0xf]
  %v120 = vld [vmem:[%s1 + $0x150] sm:$0xf]
  %v121 = vld [vmem:[%s1 + $0x154] sm:$0xf]
  %v122 = vld [vmem:[%s1 + $0x158] sm:$0xf]
  %v123 = vld [vmem:[%s1 + $0x15c] sm:$0xf]
  %v124 = vld [vmem:[%s1 + $0x160] sm:$0xf]
  %v125 = vld [vmem:[%s1 + $0x164] sm:$0xf]
  %v126 = vld [vmem:[%s1 + $0x168] sm:$0xf]
  %v127 = vld [vmem:[%s1 + $0x16c] sm:$0xf]
  %v128 = vld [vmem:[%s1 + $0x170] sm:$0xf]
  %v129 = vld [vmem:[%s1 + $0x174] sm:$0xf]
  %v130 = vld [vmem:[%s1 + $0x178] sm:$0xf]
  %v131 = vld [vmem:[%s1 + $0x17c] sm:$0xf]
  %v132 = vld [vmem:[%s2] sm:$0x1]
  %v134 = vlaneseq
  %v135 = vshrl.u32 %v134, 7
  %v136 = vsub.s32 0, %v135
  %v137 = vrot.slane %v132, %v136
  %v235 = vunpack.c.l.b16 %v36
  %v236 = vunpack.c.l.b16 %v37
  %v237 = vunpack.c.l.b16 %v38
  %v238 = vunpack.c.l.b16 %v39
  %v239 = vunpack.c.l.b16 %v40
  %v240 = vunpack.c.l.b16 %v41
  %v241 = vunpack.c.l.b16 %v42
  %v242 = vunpack.c.l.b16 %v43
  %v243 = vunpack.c.l.b16 %v44
  %v244 = vunpack.c.l.b16 %v45
  %v245 = vunpack.c.l.b16 %v46
  %v246 = vunpack.c.l.b16 %v47
  %v247 = vunpack.c.l.b16 %v48
  %v248 = vunpack.c.l.b16 %v49
  %v249 = vunpack.c.l.b16 %v50
  %v250 = vunpack.c.l.b16 %v51
  %v251 = vunpack.c.l.b16 %v52
  %v252 = vunpack.c.l.b16 %v53
  %v253 = vunpack.c.l.b16 %v54
  %v254 = vunpack.c.l.b16 %v55
  %v255 = vunpack.c.l.b16 %v56
  %v256 = vunpack.c.l.b16 %v57
  %v257 = vunpack.c.l.b16 %v58
  %v258 = vunpack.c.l.b16 %v59
  %v259 = vunpack.c.l.b16 %v60
  %v260 = vunpack.c.l.b16 %v61
  %v261 = vunpack.c.l.b16 %v62
  %v262 = vunpack.c.l.b16 %v63
  %v263 = vunpack.c.l.b16 %v64
  %v264 = vunpack.c.l.b16 %v65
  %v265 = vunpack.c.l.b16 %v66
  %v266 = vunpack.c.l.b16 %v67
  %v267 = vunpack.c.l.b16 %v68
  %v268 = vunpack.c.l.b16 %v69
  %v269 = vunpack.c.l.b16 %v70
  %v270 = vunpack.c.l.b16 %v71
  %v271 = vunpack.c.l.b16 %v72
  %v272 = vunpack.c.l.b16 %v73
  %v273 = vunpack.c.l.b16 %v74
  %v274 = vunpack.c.l.b16 %v75
  %v275 = vunpack.c.l.b16 %v76
  %v276 = vunpack.c.l.b16 %v77
  %v277 = vunpack.c.l.b16 %v78
  %v278 = vunpack.c.l.b16 %v79
  %v279 = vunpack.c.l.b16 %v80
  %v280 = vunpack.c.l.b16 %v81
  %v281 = vunpack.c.l.b16 %v82
  %v282 = vunpack.c.l.b16 %v83
  %v283 = vunpack.c.l.b16 %v84
  %v284 = vunpack.c.l.b16 %v85
  %v285 = vunpack.c.l.b16 %v86
  %v286 = vunpack.c.l.b16 %v87
  %v287 = vunpack.c.l.b16 %v88
  %v288 = vunpack.c.l.b16 %v89
  %v289 = vunpack.c.l.b16 %v90
  %v290 = vunpack.c.l.b16 %v91
  %v291 = vunpack.c.l.b16 %v92
  %v292 = vunpack.c.l.b16 %v93
  %v293 = vunpack.c.l.b16 %v94
  %v294 = vunpack.c.l.b16 %v95
  %v295 = vunpack.c.l.b16 %v96
  %v296 = vunpack.c.l.b16 %v97
  %v297 = vunpack.c.l.b16 %v98
  %v298 = vunpack.c.l.b16 %v99
  %v299 = vunpack.c.l.b16 %v100
  %v300 = vunpack.c.l.b16 %v101
  %v301 = vunpack.c.l.b16 %v102
  %v302 = vunpack.c.l.b16 %v103
  %v303 = vunpack.c.l.b16 %v104
  %v304 = vunpack.c.l.b16 %v105
  %v305 = vunpack.c.l.b16 %v106
  %v306 = vunpack.c.l.b16 %v107
  %v307 = vunpack.c.l.b16 %v108
  %v308 = vunpack.c.l.b16 %v109
  %v309 = vunpack.c.l.b16 %v110
  %v310 = vunpack.c.l.b16 %v111
  %v311 = vunpack.c.l.b16 %v112
  %v312 = vunpack.c.l.b16 %v113
  %v313 = vunpack.c.l.b16 %v114
  %v314 = vunpack.c.l.b16 %v115
  %v315 = vunpack.c.l.b16 %v116
  %v316 = vunpack.c.l.b16 %v117
  %v317 = vunpack.c.l.b16 %v118
  %v318 = vunpack.c.l.b16 %v119
  %v319 = vunpack.c.l.b16 %v120
  %v320 = vunpack.c.l.b16 %v121
  %v321 = vunpack.c.l.b16 %v122
  %v322 = vunpack.c.l.b16 %v123
  %v323 = vunpack.c.l.b16 %v124
  %v324 = vunpack.c.l.b16 %v125
  %v325 = vunpack.c.l.b16 %v126
  %v326 = vunpack.c.l.b16 %v127
  %v327 = vunpack.c.l.b16 %v128
  %v328 = vunpack.c.l.b16 %v129
  %v329 = vunpack.c.l.b16 %v130
  %v330 = vunpack.c.l.b16 %v131
  %v331 = vpack.c.b16 %v236, %v235
  %v332 = vpack.c.b16 %v238, %v237
  %v333 = vpack.c.b16 %v240, %v239
  %v334 = vpack.c.b16 %v242, %v241
  %v335 = vpack.c.b16 %v244, %v243
  %v336 = vpack.c.b16 %v246, %v245
  %v337 = vpack.c.b16 %v248, %v247
  %v338 = vpack.c.b16 %v250, %v249
  %v339 = vpack.c.b16 %v252, %v251
  %v340 = vpack.c.b16 %v254, %v253
  %v341 = vpack.c.b16 %v256, %v255
  %v342 = vpack.c.b16 %v258, %v257
  %v343 = vpack.c.b16 %v260, %v259
  %v344 = vpack.c.b16 %v262, %v261
  %v345 = vpack.c.b16 %v264, %v263
  %v346 = vpack.c.b16 %v266, %v265
  %v347 = vpack.c.b16 %v268, %v267
  %v348 = vpack.c.b16 %v270, %v269
  %v349 = vpack.c.b16 %v272, %v271
  %v350 = vpack.c.b16 %v274, %v273
  %v351 = vpack.c.b16 %v276, %v275
  %v352 = vpack.c.b16 %v278, %v277
  %v353 = vpack.c.b16 %v280, %v279
  %v354 = vpack.c.b16 %v282, %v281
  %v355 = vpack.c.b16 %v284, %v283
  %v356 = vpack.c.b16 %v286, %v285
  %v357 = vpack.c.b16 %v288, %v287
  %v358 = vpack.c.b16 %v290, %v289
  %v359 = vpack.c.b16 %v292, %v291
  %v360 = vpack.c.b16 %v294, %v293
  %v361 = vpack.c.b16 %v296, %v295
  %v362 = vpack.c.b16 %v298, %v297
  %v363 = vpack.c.b16 %v300, %v299
  %v364 = vpack.c.b16 %v302, %v301
  %v365 = vpack.c.b16 %v304, %v303
  %v366 = vpack.c.b16 %v306, %v305
  %v367 = vpack.c.b16 %v308, %v307
  %v368 = vpack.c.b16 %v310, %v309
  %v369 = vpack.c.b16 %v312, %v311
  %v370 = vpack.c.b16 %v314, %v313
  %v371 = vpack.c.b16 %v316, %v315
  %v372 = vpack.c.b16 %v318, %v317
  %v373 = vpack.c.b16 %v320, %v319
  %v374 = vpack.c.b16 %v322, %v321
  %v375 = vpack.c.b16 %v324, %v323
  %v376 = vpack.c.b16 %v326, %v325
  %v377 = vpack.c.b16 %v328, %v327
  %v378 = vpack.c.b16 %v330, %v329
  %427 = vmatprep.subr.bf16.mxu0 0
  %428 = vmatpush1.bf16.msra.mxu0 %v331
  %429 = vmatprep.subr.bf16.mxu0 0
  %430 = vmatpush1.bf16.msra.mxu0 %v332
  %431 = vmatprep.subr.bf16.mxu0 0
  %432 = vmatpush1.bf16.msra.mxu0 %v333
  %433 = vmatprep.subr.bf16.mxu0 0
  %434 = vmatpush1.bf16.msra.mxu0 %v334
  %435 = vmatprep.subr.bf16.mxu0 0
  %436 = vmatpush1.bf16.msra.mxu0 %v335
  %437 = vmatprep.subr.bf16.mxu0 0
  %438 = vmatpush1.bf16.msra.mxu0 %v336
  %439 = vmatprep.subr.bf16.mxu0 0
  %440 = vmatpush1.bf16.msra.mxu0 %v337
  %441 = vmatprep.subr.bf16.mxu0 0
  %442 = vmatpush1.bf16.msra.mxu0 %v338
  %443 = vmatprep.subr.bf16.mxu0 0
  %444 = vmatpush1.bf16.msra.mxu0 %v339
  %445 = vmatprep.subr.bf16.mxu0 0
  %446 = vmatpush1.bf16.msra.mxu0 %v340
  %447 = vmatprep.subr.bf16.mxu0 0
  %448 = vmatpush1.bf16.msra.mxu0 %v341
  %449 = vmatprep.subr.bf16.mxu0 0
  %450 = vmatpush1.bf16.msra.mxu0 %v342
  %451 = vmatprep.subr.bf16.mxu0 0
  %452 = vmatpush1.bf16.msra.mxu0 %v343
  %453 = vmatprep.subr.bf16.mxu0 0
  %454 = vmatpush1.bf16.msra.mxu0 %v344
  %455 = vmatprep.subr.bf16.mxu0 0
  %456 = vmatpush1.bf16.msra.mxu0 %v345
  %457 = vmatprep.subr.bf16.mxu0 0
  %458 = vmatpush1.bf16.msra.mxu0 %v346
  %459 = vmatprep.mubr.bf16.mxu0 %v31
  %460 = vmatmul.mubr.bf16.gmra.mrb[0].mxu0 %v30
  %v461 = vpop.f32.mrb[0].mxu0
  %v462 = vadd.f32 %v137, %v461
  %v463 = vpop.f32.mrb[0].mxu0
  %v464 = vpop.f32.mrb[0].mxu0
  %v465 = vadd.f32 %v137, %v464
  %v466 = vpop.f32.mrb[0].mxu0
  %467 = vdwg.mxu0
  %468 = vmatprep.subr.bf16.mxu0 0
  %469 = vmatpush1.bf16.msra.mxu0 %v347
  %470 = vmatprep.subr.bf16.mxu0 0
  %471 = vmatpush1.bf16.msra.mxu0 %v348
  %472 = vmatprep.subr.bf16.mxu0 0
  %473 = vmatpush1.bf16.msra.mxu0 %v349
  %474 = vmatprep.subr.bf16.mxu0 0
  %475 = vmatpush1.bf16.msra.mxu0 %v350
  %476 = vmatprep.subr.bf16.mxu0 0
  %477 = vmatpush1.bf16.msra.mxu0 %v351
  %478 = vmatprep.subr.bf16.mxu0 0
  %479 = vmatpush1.bf16.msra.mxu0 %v352
  %480 = vmatprep.subr.bf16.mxu0 0
  %481 = vmatpush1.bf16.msra.mxu0 %v353
  %482 = vmatprep.subr.bf16.mxu0 0
  %483 = vmatpush1.bf16.msra.mxu0 %v354
  %484 = vmatprep.subr.bf16.mxu0 0
  %485 = vmatpush1.bf16.msra.mxu0 %v355
  %486 = vmatprep.subr.bf16.mxu0 0
  %487 = vmatpush1.bf16.msra.mxu0 %v356
  %488 = vmatprep.subr.bf16.mxu0 0
  %489 = vmatpush1.bf16.msra.mxu0 %v357
  %490 = vmatprep.subr.bf16.mxu0 0
  %491 = vmatpush1.bf16.msra.mxu0 %v358
  %492 = vmatprep.subr.bf16.mxu0 0
  %493 = vmatpush1.bf16.msra.mxu0 %v359
  %494 = vmatprep.subr.bf16.mxu0 0
  %495 = vmatpush1.bf16.msra.mxu0 %v360
  %496 = vmatprep.subr.bf16.mxu0 0
  %497 = vmatpush1.bf16.msra.mxu0 %v361
  %498 = vmatprep.subr.bf16.mxu0 0
  %499 = vmatpush1.bf16.msra.mxu0 %v362
  %500 = vmatprep.mubr.bf16.mxu0 %v33
  %501 = vmatmul.mubr.bf16.gmra.mrb[0].mxu0 %v32
  %v502 = vpop.f32.mrb[0].mxu0
  %v503 = vadd.f32 %v462, %v502
  %v504 = vpop.f32.mrb[0].mxu0
  %v505 = vpop.f32.mrb[0].mxu0
  %v506 = vadd.f32 %v465, %v505
  %v507 = vpop.f32.mrb[0].mxu0
  %508 = vdwg.mxu0
  %509 = vmatprep.subr.bf16.mxu0 0
  %510 = vmatpush1.bf16.msra.mxu0 %v363
  %511 = vmatprep.subr.bf16.mxu0 0
  %512 = vmatpush1.bf16.msra.mxu0 %v364
  %513 = vmatprep.subr.bf16.mxu0 0
  %514 = vmatpush1.bf16.msra.mxu0 %v365
  %515 = vmatprep.subr.bf16.mxu0 0
  %516 = vmatpush1.bf16.msra.mxu0 %v366
  %517 = vmatprep.subr.bf16.mxu0 0
  %518 = vmatpush1.bf16.msra.mxu0 %v367
  %519 = vmatprep.subr.bf16.mxu0 0
  %520 = vmatpush1.bf16.msra.mxu0 %v368
  %521 = vmatprep.subr.bf16.mxu0 0
  %522 = vmatpush1.bf16.msra.mxu0 %v369
  %523 = vmatprep.subr.bf16.mxu0 0
  %524 = vmatpush1.bf16.msra.mxu0 %v370
  %525 = vmatprep.subr.bf16.mxu0 0
  %526 = vmatpush1.bf16.msra.mxu0 %v371
  %527 = vmatprep.subr.bf16.mxu0 0
  %528 = vmatpush1.bf16.msra.mxu0 %v372
  %529 = vmatprep.subr.bf16.mxu0 0
  %530 = vmatpush1.bf16.msra.mxu0 %v373
  %531 = vmatprep.subr.bf16.mxu0 0
  %532 = vmatpush1.bf16.msra.mxu0 %v374
  %533 = vmatprep.subr.bf16.mxu0 0
  %534 = vmatpush1.bf16.msra.mxu0 %v375
  %535 = vmatprep.subr.bf16.mxu0 0
  %536 = vmatpush1.bf16.msra.mxu0 %v376
  %537 = vmatprep.subr.bf16.mxu0 0
  %538 = vmatpush1.bf16.msra.mxu0 %v377
  %539 = vmatprep.subr.bf16.mxu0 0
  %540 = vmatpush1.bf16.msra.mxu0 %v378
  %541 = vmatprep.mubr.bf16.mxu0 %v35
  %542 = vmatmul.mubr.bf16.gmra.mrb[0].mxu0 %v34
  %v543 = vpop.f32.mrb[0].mxu0
  %v544 = vadd.f32 %v503, %v543
  %v545 = vpop.f32.mrb[0].mxu0
  %v546 = vpop.f32.mrb[0].mxu0
  %v547 = vadd.f32 %v506, %v546
  %v548 = vpop.f32.mrb[0].mxu0
  %549 = vdwg.mxu0
  %v550 = vld [vmem:[%s3] sm:$0xff]
  %v551 = vld [vmem:[%s3 + $0x8] sm:$0xff]
  %553 = vset.pattern.permute.xlu0 0
  %554 = vperm.xlu0 %553, %v550
  %v555 = vpop.permute.xlu0 %554
  %558 = vset.pattern.permute.xlu0 0
  %559 = vperm.xlu0 %558, %v551
  %v560 = vpop.permute.xlu0 %559
  %v562 = vmul.f32 %v544, %v555
  %v563 = vmul.f32 %v547, %v560
  %564 = vst [vmem:[%s4] sm:$0xff] %v562
  %565 = vst [vmem:[%s4 + $0x8] sm:$0xff] %v563
  // Predicated region
  $region18: #{section_ext_forward.1} parent=0 // pred_check
    _
  $region19: #{section_ext_forward.1} parent=0 // pred_check_branch
    %567 = sbr.rel (0) target = $region21
  $region20: #{section_ext_forward.1} parent=0 // pred_region
    _
  $region21: #{section_ext_forward.1} parent=0 // pred_fallthru
    _
  // Predicated region
  $region22: #{section_ext_forward.1} parent=0 // pred_check
    _
  $region23: #{section_ext_forward.1} parent=0 // pred_check_branch
    %569 = sbr.rel (0) target = $region25
  $region24: #{section_ext_forward.1} parent=0 // pred_region
    _
  $region25: #{section_ext_forward.1} parent=0 // pred_fallthru
    _

</llo_original>
